<compile_context>
chip_gen: v7x
topology: tpu7x:2x2x1
jax: 0.10.0
libtpu: 0.0.40
codegen_flags: <defaults>
</compile_context>

<pallas_src>
import functools

import jax
import jax.numpy as jnp
from jax.experimental import pallas as pl
from jax.experimental.pallas import tpu as pltpu


VMEM_LIMIT = 32 * 1024 * 1024   # conservative: fits v7x's 64 MiB/TC budget


def _round_up(x, m):
    return ((x + m - 1) // m) * m


def _k_tiling(K):
    Kp = _round_up(K, 128)
    if Kp <= 1024:
        return Kp, Kp           # single K step for small reductions
    Kp = _round_up(K, 512)
    return Kp, 512


def _n_tiling(N):
    Np = _round_up(N, 128)
    tn = 256 if (Np % 256 == 0) else 128
    return Np, min(tn, Np)


def _m_tiling(M):
    tm = min(_round_up(M, 8), 256)
    Mp = _round_up(M, tm)
    return Mp, tm


# ---------------------------------------------------------------------------
# Tiled GEMM kernels: dot + bias (+ relu) (+ residual) fused in the epilogue
# ---------------------------------------------------------------------------
def _gemm_bias_kernel(a_ref, b_ref, bias_ref, o_ref, acc_ref, *, relu):
    @pl.when(pl.program_id(2) == 0)
    def _init():
        acc_ref[...] = jnp.zeros_like(acc_ref)

    acc_ref[...] += jnp.dot(a_ref[...], b_ref[...],
                            preferred_element_type=jnp.float32)

    @pl.when(pl.program_id(2) == pl.num_programs(2) - 1)
    def _finalize():
        out = acc_ref[...] + bias_ref[...]
        if relu:
            out = jnp.maximum(out, 0.0)
        o_ref[...] = out.astype(o_ref.dtype)


def _gemm_bias_residual_kernel(a_ref, b_ref, bias_ref, r_ref, o_ref, acc_ref):
    @pl.when(pl.program_id(2) == 0)
    def _init():
        acc_ref[...] = jnp.zeros_like(acc_ref)

    acc_ref[...] += jnp.dot(a_ref[...], b_ref[...],
                            preferred_element_type=jnp.float32)

    @pl.when(pl.program_id(2) == pl.num_programs(2) - 1)
    def _finalize():
        # ResNet block: residual add AFTER bias, no ReLU after the add.
        o_ref[...] = (acc_ref[...] + bias_ref[...] + r_ref[...]).astype(o_ref.dtype)


def _matmul_fused(a, b, bias, residual=None, relu=False, *, tm, tn, tk):
    Mp, Kp = a.shape
    _, Np = b.shape
    grid = (Mp // tm, Np // tn, Kp // tk)

    in_specs = [
        pl.BlockSpec((tm, tk), lambda i, j, k: (i, k)),
        pl.BlockSpec((tk, tn), lambda i, j, k: (k, j)),
        pl.BlockSpec((1, tn), lambda i, j, k: (0, j)),
    ]
    args = [a, b, bias]
    if residual is not None:
        kernel = _gemm_bias_residual_kernel
        in_specs.append(pl.BlockSpec((tm, tn), lambda i, j, k: (i, j)))
        args.append(residual)
    else:
        kernel = functools.partial(_gemm_bias_kernel, relu=relu)

    return pl.pallas_call(
        kernel,
        out_shape=jax.ShapeDtypeStruct((Mp, Np), jnp.float32),
        grid=grid,
        in_specs=in_specs,
        out_specs=pl.BlockSpec((tm, tn), lambda i, j, k: (i, j)),
        scratch_shapes=[pltpu.VMEM((tm, tn), jnp.float32)],
        compiler_params=pltpu.CompilerParams(
            dimension_semantics=("parallel", "parallel", "arbitrary"),
            vmem_limit_bytes=VMEM_LIMIT,
        ),
    )(*args)


# ---------------------------------------------------------------------------
# Weight prep (done ONCE at init): OIHW -> (KH*KW*Cin, Cout), padded, bf16
# ---------------------------------------------------------------------------
def prep_conv_params(w_oihw, bias):
    O, Ci, KH, KW = w_oihw.shape
    K = KH * KW * Ci
    Kp, tk = _k_tiling(K)
    Np, tn = _n_tiling(O)
    Bmat = jnp.transpose(w_oihw, (2, 3, 1, 0)).reshape(K, O)
    Bmat = jnp.pad(Bmat, ((0, Kp - K), (0, Np - O))).astype(jnp.bfloat16)
    bias2 = jnp.pad(bias.astype(jnp.float32), (0, Np - O)).reshape(1, Np)
    return dict(B=Bmat, bias=bias2, KH=KH, KW=KW, Cin=Ci, Cout=O,
                K=K, Kp=Kp, tk=tk, Np=Np, tn=tn)


# ---------------------------------------------------------------------------
# Conv2d = im2col (thin glue) + tiled Pallas GEMM with fused epilogue
# ---------------------------------------------------------------------------
def conv2d_pallas(x_nhwc, pw, *, stride=1, pad=0, relu=False,
                  residual_nhwc=None):
    N, H, W, C = x_nhwc.shape
    KH, KW, Cout = pw["KH"], pw["KW"], pw["Cout"]
    assert C == pw["Cin"]
    xp = jnp.pad(x_nhwc, ((0, 0), (pad, pad), (pad, pad), (0, 0))) if pad \
        else x_nhwc
    Ho = (H + 2 * pad - KH) // stride + 1
    Wo = (W + 2 * pad - KW) // stride + 1

    # im2col patch extraction (wrapper-side glue; channel-fastest to match B).
    # TODO(synk): for large activations, fold the KH*KW taps into the kernel's
    # K grid axis (shifted windows of the padded NHWC input) to avoid the
    # HBM-materialized patch expansion.
    taps = []
    for i in range(KH):
        for j in range(KW):
            taps.append(xp[:, i:i + stride * (Ho - 1) + 1:stride,
                            j:j + stride * (Wo - 1) + 1:stride, :])
    patches = taps[0] if len(taps) == 1 else jnp.concatenate(taps, axis=-1)

    M = N * Ho * Wo
    Mp, tm = _m_tiling(M)
    A = patches.reshape(M, pw["K"]).astype(jnp.bfloat16)
    A = jnp.pad(A, ((0, Mp - M), (0, pw["Kp"] - pw["K"])))

    res = None
    if residual_nhwc is not None:
        res = residual_nhwc.reshape(M, Cout).astype(jnp.float32)
        res = jnp.pad(res, ((0, Mp - M), (0, pw["Np"] - Cout)))

    out = _matmul_fused(A, pw["B"], pw["bias"], residual=res, relu=relu,
                        tm=tm, tn=pw["tn"], tk=pw["tk"])
    return out[:M, :Cout].reshape(N, Ho, Wo, Cout)


# ---------------------------------------------------------------------------
# ResNetBlock params + forward (matches the PyTorch module)
# ---------------------------------------------------------------------------
def init_resnet_block(key, in_ch, out_ch, k=3, ds=False):
    def conv_init(ck, o, i, kk):
        kw, kb = jax.random.split(ck)
        fan_in = i * kk * kk
        bound = 1.0 / (fan_in ** 0.5)
        w = jax.random.uniform(kw, (o, i, kk, kk), jnp.float32, -bound, bound)
        b = jax.random.uniform(kb, (o,), jnp.float32, -bound, bound)
        return w, b

    k1, k2, k3 = jax.random.split(key, 3)
    w1, b1 = conv_init(k1, out_ch, in_ch, k)
    w2, b2 = conv_init(k2, out_ch, out_ch, k)
    params = {
        "ds": ds,
        "raw": {"conv1": (w1, b1), "conv2": (w2, b2)},
        "conv1": prep_conv_params(w1, b1),
        "conv2": prep_conv_params(w2, b2),
    }
    if ds:
        wd, bd = conv_init(k3, out_ch, in_ch, 1)
        params["raw"]["conv_1x1"] = (wd, bd)
        params["conv_1x1"] = prep_conv_params(wd, bd)
    return params


def resnet_block_forward(params, x_nchw):
    x = jnp.transpose(x_nchw, (0, 2, 3, 1)).astype(jnp.float32)   # NCHW -> NHWC
    s = 2 if params["ds"] else 1
    f = conv2d_pallas(x, params["conv1"], stride=s, pad=1, relu=True)
    if params["ds"]:
        shortcut = conv2d_pallas(x, params["conv_1x1"], stride=2, pad=0)
    else:
        shortcut = x
    out = conv2d_pallas(f, params["conv2"], stride=1, pad=1,
                        residual_nhwc=shortcut)
    return jnp.transpose(out, (0, 3, 1, 2))                        # NHWC -> NCHW


# ---------------------------------------------------------------------------
# Pure-JAX reference (f32, highest precision) for correctness checking
# ---------------------------------------------------------------------------
def _ref_conv(x_nchw, w, b, stride, pad):
    out = jax.lax.conv_general_dilated(
        x_nchw, w, window_strides=(stride, stride),
        padding=((pad, pad), (pad, pad)),
        dimension_numbers=("NCHW", "OIHW", "NCHW"),
        precision=jax.lax.Precision.HIGHEST)
    return out + b.reshape(1, -1, 1, 1)


def resnet_block_reference(params, x):
    w1, b1 = params["raw"]["conv1"]
    w2, b2 = params["raw"]["conv2"]
    s = 2 if params["ds"] else 1
    f = jax.nn.relu(_ref_conv(x, w1, b1, s, 1))
    f = _ref_conv(f, w2, b2, 1, 1)
    if params["ds"]:
        wd, bd = params["raw"]["conv_1x1"]
        x = _ref_conv(x, wd, bd, 2, 0)
    return f + x


if __name__ == "__main__":
    key = jax.random.PRNGKey(0)
    kp1, kp2, kx = jax.random.split(key, 3)

    x = jax.random.normal(kx, (2, 32, 16, 16), jnp.float32)

    # Downsampling block: stride-2 conv1, 1x1 stride-2 shortcut, residual add.
    blk_ds = init_resnet_block(kp1, 32, 64, ds=True)
    out_ds = jax.block_until_ready(resnet_block_forward(blk_ds, x))
    assert out_ds.shape == (2, 64, 8, 8)

    # Identity block: stride-1 convs, identity shortcut.
    blk_id = init_resnet_block(kp2, 32, 32, ds=False)
    out_id = jax.block_until_ready(resnet_block_forward(blk_id, x))
    assert out_id.shape == (2, 32, 16, 16)

    for out, blk in ((out_ds, blk_ds), (out_id, blk_id)):
        ref = resnet_block_reference(blk, x)
        assert bool(jnp.all(jnp.isfinite(out)))
        err = float(jnp.max(jnp.abs(out - ref)) /
                    (jnp.max(jnp.abs(ref)) + 1e-6))
        assert err < 5e-2, f"max relative error too large: {err}"

    print("KERNEL_OK")
</pallas_src>

<mosaic_0001>
module attributes {stable_mosaic.version = 11 : i64} {
  func.func @_gemm_bias_kernel(%arg0: i32, %arg1: i32, %arg2: i32, %arg3: memref<128x384xbf16, #tpu.memory_space<vmem>>, %arg4: memref<384x128xbf16, #tpu.memory_space<vmem>>, %arg5: memref<1x128xf32, #tpu.memory_space<vmem>>, %arg6: memref<128x128xf32, #tpu.memory_space<vmem>>, %arg7: memref<128x128xf32, #tpu.memory_space<vmem>>) attributes {dimension_semantics = [#tpu.dimension_semantics<parallel>, #tpu.dimension_semantics<parallel>, #tpu.dimension_semantics<arbitrary>], iteration_bounds = array<i64: 1, 1, 1>, scalar_prefetch = 0 : i64, scratch_operands = 1 : i64, tpu.core_type = #tpu.core_type<tc>, window_params = [{transform_indices = @transform_0, window_bounds = array<i64: 128, 384>}, {transform_indices = @transform_1, window_bounds = array<i64: 384, 128>}, {transform_indices = @transform_2, window_bounds = array<i64: 1, 128>}, {transform_indices = @transform_3, window_bounds = array<i64: 128, 128>}]} {
    %c0_i32 = arith.constant 0 : i32
    %0 = arith.cmpi eq, %arg2, %c0_i32 : i32
    %1 = arith.extui %0 : i1 to i32
    %c0_i32_0 = arith.constant 0 : i32
    %2 = arith.cmpi ne, %1, %c0_i32_0 : i32
    scf.if %2 {
      %cst_10 = arith.constant 0.000000e+00 : f32
      %12 = vector.broadcast %cst_10 : f32 to vector<128x128xf32>
      %c0_11 = arith.constant 0 : index
      %c0_12 = arith.constant 0 : index
      %13 = vector.load %arg7[%c0_11, %c0_12] : memref<128x128xf32, #tpu.memory_space<vmem>>, vector<128x128xf32>
      tpu.vector_store %arg7[%c0_11, %c0_12], %12 {strides = array<i32>} : memref<128x128xf32, #tpu.memory_space<vmem>>, vector<128x128xf32>,
    } else {
    }
    %c0 = arith.constant 0 : index
    %c0_1 = arith.constant 0 : index
    %3 = vector.load %arg7[%c0, %c0_1] : memref<128x128xf32, #tpu.memory_space<vmem>>, vector<128x128xf32>
    %c0_2 = arith.constant 0 : index
    %c0_3 = arith.constant 0 : index
    %4 = vector.load %arg3[%c0_2, %c0_3] : memref<128x384xbf16, #tpu.memory_space<vmem>>, vector<128x384xbf16>
    %c0_4 = arith.constant 0 : index
    %c0_5 = arith.constant 0 : index
    %5 = vector.load %arg4[%c0_4, %c0_5] : memref<384x128xbf16, #tpu.memory_space<vmem>>, vector<384x128xbf16>
    %cst = arith.constant dense<0.000000e+00> : vector<128x128xf32>
    %6 = tpu.matmul %4, %5, %cst {dimension_numbers = #tpu.dot_dimension_numbers<[1], [0], [0], [1], [0, 0, 1, 1], [], []>} : vector<128x384xbf16>, vector<384x128xbf16>, vector<128x128xf32> -> vector<128x128xf32>
    %7 = arith.addf %3, %6 : vector<128x128xf32>
    %c0_6 = arith.constant 0 : index
    %c0_7 = arith.constant 0 : index
    %8 = vector.load %arg7[%c0_6, %c0_7] : memref<128x128xf32, #tpu.memory_space<vmem>>, vector<128x128xf32>
    tpu.vector_store %arg7[%c0_6, %c0_7], %7 {strides = array<i32>} : memref<128x128xf32, #tpu.memory_space<vmem>>, vector<128x128xf32>,
    %c0_i32_8 = arith.constant 0 : i32
    %9 = arith.cmpi eq, %arg2, %c0_i32_8 : i32
    %10 = arith.extui %9 : i1 to i32
    %c0_i32_9 = arith.constant 0 : i32
    %11 = arith.cmpi ne, %10, %c0_i32_9 : i32
    scf.if %11 {
      %c0_10 = arith.constant 0 : index
      %c0_11 = arith.constant 0 : index
      %12 = vector.load %arg7[%c0_10, %c0_11] : memref<128x128xf32, #tpu.memory_space<vmem>>, vector<128x128xf32>
      %c0_12 = arith.constant 0 : index
      %c0_13 = arith.constant 0 : index
      %13 = vector.load %arg5[%c0_12, %c0_13] : memref<1x128xf32, #tpu.memory_space<vmem>>, vector<1x128xf32>
      %14 = vector.broadcast %13 : vector<1x128xf32> to vector<128x128xf32>
      %15 = arith.addf %12, %14 : vector<128x128xf32>
      %cst_14 = arith.constant 0.000000e+00 : f32
      %16 = vector.broadcast %cst_14 : f32 to vector<128x128xf32>
      %17 = arith.maximumf %15, %16 : vector<128x128xf32>
      %c0_15 = arith.constant 0 : index
      %c0_16 = arith.constant 0 : index
      %18 = vector.load %arg6[%c0_15, %c0_16] : memref<128x128xf32, #tpu.memory_space<vmem>>, vector<128x128xf32>
      tpu.vector_store %arg6[%c0_15, %c0_16], %17 {strides = array<i32>} : memref<128x128xf32, #tpu.memory_space<vmem>>, vector<128x128xf32>,
    } else {
    }
    return
  }
  func.func @transform_0(%arg0: i32, %arg1: i32, %arg2: i32) -> (i32, i32) {
    %c0_i32 = arith.constant 0 : i32
    return %arg0, %arg2 : i32, i32
  }
  func.func @transform_1(%arg0: i32, %arg1: i32, %arg2: i32) -> (i32, i32) {
    %c0_i32 = arith.constant 0 : i32
    return %arg2, %arg1 : i32, i32
  }
  func.func @transform_2(%arg0: i32, %arg1: i32, %arg2: i32) -> (i32, i32) {
    %c0_i32 = arith.constant 0 : i32
    %c0_i32_0 = arith.constant 0 : i32
    return %c0_i32, %arg1 : i32, i32
  }
  func.func @transform_3(%arg0: i32, %arg1: i32, %arg2: i32) -> (i32, i32) {
    %c0_i32 = arith.constant 0 : i32
    return %arg0, %arg1 : i32, i32
  }
}

</mosaic_0001>

<llo_original>
// kernel: tpu_custom_call.1
$region0: #{tpu_custom_call.1}
  #allocation0 [shape = 'u32[]', space=smem, size = 0x4, offset = 0x4, fixed_abs, tag = 'smem constant byte address 0x4 - core index']
  #allocation1 [shape = 'u32[144,128]{1,0:T(1,128)}', space=vmem, size = 0x12000, scoped, tag = 'internal scratch']
  #allocation2 [shape = 'f32[128,128]{1,0:T(8,128)}', space=vmem, size = 0x10000, scoped, tag = 'scratch operand']
  %s0 = inlined_call_operand.hbm [shape: bf16[128,384], index: 0, kind: input, shape index: {}]
  %s1 = inlined_call_operand.hbm [shape: bf16[384,128], index: 1, kind: input, shape index: {}]
  %s2 = inlined_call_operand.vmem [shape: f32[1,128], index: 2, kind: input, shape index: {}]
  %s3 = inlined_call_operand.hbm [shape: f32[128,128], index: 3, kind: output, shape index: {}]
  %s4 = sld [smem:[#allocation0]]
  $region38: #{tpu_custom_call.1} parent=0
    _
  %s6 = ssub.s32 1, %s4
  %s7 = scalar_select 0, %s6, %s4
  $region1: #{tpu_custom_call.1} parent=0
    #allocation3 [shape = 'u8[98304]{0}', space=vmem, size = 0x18000, scoped, tag = 'input window, operand 0, single buffered']
    #allocation4 [shape = 's32[1]{0}', space=sflag, size = 0x4, scoped, tag = 'scoped memory for tpu_custom_call.1']
    #allocation5 [shape = 's32[1]{0}', space=sflag, size = 0x4, scoped, tag = 'scoped memory for tpu_custom_call.1']
    #allocation6 [shape = 'u8[98304]{0}', space=vmem, size = 0x18000, scoped, tag = 'input window, operand 1, single buffered']
    #allocation7 [shape = 's32[1]{0}', space=sflag, size = 0x4, scoped, tag = 'scoped memory for tpu_custom_call.1']
    #allocation8 [shape = 'u8[65536]{0}', space=vmem, size = 0x10000, scoped, tag = 'output window, operand 0, single buffered']
    %8 = vsyncpa [#allocation4], 0
    %9 = vsyncpa [#allocation7], 0
    %10 = vsyncpa [#allocation5], 0
    // Predicated region
    $region2: #{tpu_custom_call.1} parent=1 // pred_check
      _
    $region3: #{tpu_custom_call.1} parent=1 // pred_check_branch
      %12 = sbr.rel (0) target = $region5
    $region4: #{tpu_custom_call.1} parent=1 // pred_region
      %s14 = ssub.s32 3072, 3072
      %15 = vsyncadd [#allocation4], %s14
      %s16 = sshll.u32 [#allocation3], 4
      %s17 = int_to_ptr.vmem [resolvable:$true] %s16
      %22 = dma.hbm_to_vmem [thread:$0]  %s0, 3072, %s17, [#allocation4], 192, 192, 12
    $region5: #{tpu_custom_call.1} parent=1 // pred_fallthru
      _
    // Predicated region
    $region6: #{tpu_custom_call.1} parent=1 // pred_check
      _
    $region7: #{tpu_custom_call.1} parent=1 // pred_check_branch
      %24 = sbr.rel (0) target = $region9
    $region8: #{tpu_custom_call.1} parent=1 // pred_region
      %s26 = ssub.s32 3072, 3072
      %27 = vsyncadd [#allocation7], %s26
      %s28 = sshll.u32 [#allocation6], 4
      %s29 = int_to_ptr.vmem [resolvable:$true] %s28
      %34 = dma.hbm_to_vmem [thread:$0]  %s1, 3072, %s29, [#allocation7], 64, 64, 4
    $region9: #{tpu_custom_call.1} parent=1 // pred_fallthru
      _
    // Predicated region
    $region10: #{tpu_custom_call.1} parent=1 // pred_check
      _
    $region11: #{tpu_custom_call.1} parent=1 // pred_check_branch
      %36 = sbr.rel (0) target = $region13
    $region12: #{tpu_custom_call.1} parent=1 // pred_region
      _
    $region13: #{tpu_custom_call.1} parent=1 // pred_fallthru
      _
    // Predicated region
    $region14: #{tpu_custom_call.1} parent=1 // pred_check
      _
    $region15: #{tpu_custom_call.1} parent=1 // pred_check_branch
      %38 = sbr.rel (0) target = $region17
    $region16: #{tpu_custom_call.1} parent=1 // pred_region
      %39 = dma.done [#allocation4], 3072
    $region17: #{tpu_custom_call.1} parent=1 // pred_fallthru
      _
    // Predicated region
    $region18: #{tpu_custom_call.1} parent=1 // pred_check
      _
    $region19: #{tpu_custom_call.1} parent=1 // pred_check_branch
      %41 = sbr.rel (0) target = $region21
    $region20: #{tpu_custom_call.1} parent=1 // pred_region
      %42 = dma.done [#allocation7], 3072
    $region21: #{tpu_custom_call.1} parent=1 // pred_fallthru
      _
    %p44 = scmp.eq.s32.totalorder 0, 0
    // Predicated region
    $region22: #{tpu_custom_call.1} parent=1 // pred_check
      %p45 = pneg %p44
    $region23: #{tpu_custom_call.1} parent=1 // pred_check_branch
      %47 = sbr.rel (%p45) target = $region25
    $region24: #{tpu_custom_call.1} parent=1 // pred_region
      %48 = vst [vmem:[#allocation2] sm:$0xff] 0.0
      %49 = vst [vmem:[#allocation2 + $0x8] sm:$0xff] 0.0
      %50 = vst [vmem:[#allocation2 + $0x10] sm:$0xff] 0.0
      %51 = vst [vmem:[#allocation2 + $0x18] sm:$0xff] 0.0
      %52 = vst [vmem:[#allocation2 + $0x20] sm:$0xff] 0.0
      %53 = vst [vmem:[#allocation2 + $0x28] sm:$0xff] 0.0
      %54 = vst [vmem:[#allocation2 + $0x30] sm:$0xff] 0.0
      %55 = vst [vmem:[#allocation2 + $0x38] sm:$0xff] 0.0
      %56 = vst [vmem:[#allocation2 + $0x40] sm:$0xff] 0.0
      %57 = vst [vmem:[#allocation2 + $0x48] sm:$0xff] 0.0
      %58 = vst [vmem:[#allocation2 + $0x50] sm:$0xff] 0.0
      %59 = vst [vmem:[#allocation2 + $0x58] sm:$0xff] 0.0
      %60 = vst [vmem:[#allocation2 + $0x60] sm:$0xff] 0.0
      %61 = vst [vmem:[#allocation2 + $0x68] sm:$0xff] 0.0
      %62 = vst [vmem:[#allocation2 + $0x70] sm:$0xff] 0.0
      %63 = vst [vmem:[#allocation2 + $0x78] sm:$0xff] 0.0
    $region25: #{tpu_custom_call.1} parent=1 // pred_fallthru
      _
    %v64 = vld [vmem:[#allocation2] sm:$0xff]
    %v65 = vld [vmem:[#allocation2 + $0x8] sm:$0xff]
    %v66 = vld [vmem:[#allocation2 + $0x10] sm:$0xff]
    %v67 = vld [vmem:[#allocation2 + $0x18] sm:$0xff]
    %v68 = vld [vmem:[#allocation2 + $0x20] sm:$0xff]
    %v69 = vld [vmem:[#allocation2 + $0x28] sm:$0xff]
    %v70 = vld [vmem:[#allocation2 + $0x30] sm:$0xff]
    %v71 = vld [vmem:[#allocation2 + $0x38] sm:$0xff]
    %v72 = vld [vmem:[#allocation2 + $0x40] sm:$0xff]
    %v73 = vld [vmem:[#allocation2 + $0x48] sm:$0xff]
    %v74 = vld [vmem:[#allocation2 + $0x50] sm:$0xff]
    %v75 = vld [vmem:[#allocation2 + $0x58] sm:$0xff]
    %v76 = vld [vmem:[#allocation2 + $0x60] sm:$0xff]
    %v77 = vld [vmem:[#allocation2 + $0x68] sm:$0xff]
    %v78 = vld [vmem:[#allocation2 + $0x70] sm:$0xff]
    %v79 = vld [vmem:[#allocation2 + $0x78] sm:$0xff]
    %v80 = vld [vmem:[#allocation3] sm:$0xff]
    %v81 = vld [vmem:[#allocation3 + $0x8] sm:$0xf]
    %v82 = vld [vmem:[#allocation3 + $0xc] sm:$0xff]
    %v83 = vld [vmem:[#allocation3 + $0x14] sm:$0xf]
    %v84 = vld [vmem:[#allocation3 + $0x18] sm:$0xff]
    %v85 = vld [vmem:[#allocation3 + $0x20] sm:$0xf]
    %v86 = vld [vmem:[#allocation3 + $0x24] sm:$0xff]
    %v87 = vld [vmem:[#allocation3 + $0x2c] sm:$0xf]
    %v88 = vld [vmem:[#allocation3 + $0x30] sm:$0xff]
    %v89 = vld [vmem:[#allocation3 + $0x38] sm:$0xf]
    %v90 = vld [vmem:[#allocation3 + $0x3c] sm:$0xff]
    %v91 = vld [vmem:[#allocation3 + $0x44] sm:$0xf]
    %v92 = vld [vmem:[#allocation3 + $0x48] sm:$0xff]
    %v93 = vld [vmem:[#allocation3 + $0x50] sm:$0xf]
    %v94 = vld [vmem:[#allocation3 + $0x54] sm:$0xff]
    %v95 = vld [vmem:[#allocation3 + $0x5c] sm:$0xf]
    %v96 = vld [vmem:[#allocation3 + $0x60] sm:$0xff]
    %v97 = vld [vmem:[#allocation3 + $0x68] sm:$0xf]
    %v98 = vld [vmem:[#allocation3 + $0x6c] sm:$0xff]
    %v99 = vld [vmem:[#allocation3 + $0x74] sm:$0xf]
    %v100 = vld [vmem:[#allocation3 + $0x78] sm:$0xff]
    %v101 = vld [vmem:[#allocation3 + $0x80] sm:$0xf]
    %v102 = vld [vmem:[#allocation3 + $0x84] sm:$0xff]
    %v103 = vld [vmem:[#allocation3 + $0x8c] sm:$0xf]
    %v104 = vld [vmem:[#allocation3 + $0x90] sm:$0xff]
    %v105 = vld [vmem:[#allocation3 + $0x98] sm:$0xf]
    %v106 = vld [vmem:[#allocation3 + $0x9c] sm:$0xff]
    %v107 = vld [vmem:[#allocation3 + $0xa4] sm:$0xf]
    %v108 = vld [vmem:[#allocation3 + $0xa8] sm:$0xff]
    %v109 = vld [vmem:[#allocation3 + $0xb0] sm:$0xf]
    %v110 = vld [vmem:[#allocation3 + $0xb4] sm:$0xff]
    %v111 = vld [vmem:[#allocation3 + $0xbc] sm:$0xf]
    %v112 = vld [vmem:[#allocation6] sm:$0xf]
    %v113 = vld [vmem:[#allocation6 + $0x4] sm:$0xf]
    %v114 = vld [vmem:[#allocation6 + $0x8] sm:$0xf]
    %v115 = vld [vmem:[#allocation6 + $0xc] sm:$0xf]
    %v116 = vld [vmem:[#allocation6 + $0x10] sm:$0xf]
    %v117 = vld [vmem:[#allocation6 + $0x14] sm:$0xf]
    %v118 = vld [vmem:[#allocation6 + $0x18] sm:$0xf]
    %v119 = vld [vmem:[#allocation6 + $0x1c] sm:$0xf]
    %v120 = vld [vmem:[#allocation6 + $0x20] sm:$0xf]
    %v121 = vld [vmem:[#allocation6 + $0x24] sm:$0xf]
    %v122 = vld [vmem:[#allocation6 + $0x28] sm:$0xf]
    %v123 = vld [vmem:[#allocation6 + $0x2c] sm:$0xf]
    %v124 = vld [vmem:[#allocation6 + $0x30] sm:$0xf]
    %v125 = vld [vmem:[#allocation6 + $0x34] sm:$0xf]
    %v126 = vld [vmem:[#allocation6 + $0x38] sm:$0xf]
    %v127 = vld [vmem:[#allocation6 + $0x3c] sm:$0xf]
    %v128 = vld [vmem:[#allocation6 + $0x40] sm:$0xf]
    %v129 = vld [vmem:[#allocation6 + $0x44] sm:$0xf]
    %v130 = vld [vmem:[#allocation6 + $0x48] sm:$0xf]
    %v131 = vld [vmem:[#allocation6 + $0x4c] sm:$0xf]
    %v132 = vld [vmem:[#allocation6 + $0x50] sm:$0xf]
    %v133 = vld [vmem:[#allocation6 + $0x54] sm:$0xf]
    %v134 = vld [vmem:[#allocation6 + $0x58] sm:$0xf]
    %v135 = vld [vmem:[#allocation6 + $0x5c] sm:$0xf]
    %v136 = vld [vmem:[#allocation6 + $0x60] sm:$0xf]
    %v137 = vld [vmem:[#allocation6 + $0x64] sm:$0xf]
    %v138 = vld [vmem:[#allocation6 + $0x68] sm:$0xf]
    %v139 = vld [vmem:[#allocation6 + $0x6c] sm:$0xf]
    %v140 = vld [vmem:[#allocation6 + $0x70] sm:$0xf]
    %v141 = vld [vmem:[#allocation6 + $0x74] sm:$0xf]
    %v142 = vld [vmem:[#allocation6 + $0x78] sm:$0xf]
    %v143 = vld [vmem:[#allocation6 + $0x7c] sm:$0xf]
    %v144 = vld [vmem:[#allocation6 + $0x80] sm:$0xf]
    %v145 = vld [vmem:[#allocation6 + $0x84] sm:$0xf]
    %v146 = vld [vmem:[#allocation6 + $0x88] sm:$0xf]
    %v147 = vld [vmem:[#allocation6 + $0x8c] sm:$0xf]
    %v148 = vld [vmem:[#allocation6 + $0x90] sm:$0xf]
    %v149 = vld [vmem:[#allocation6 + $0x94] sm:$0xf]
    %v150 = vld [vmem:[#allocation6 + $0x98] sm:$0xf]
    %v151 = vld [vmem:[#allocation6 + $0x9c] sm:$0xf]
    %v152 = vld [vmem:[#allocation6 + $0xa0] sm:$0xf]
    %v153 = vld [vmem:[#allocation6 + $0xa4] sm:$0xf]
    %v154 = vld [vmem:[#allocation6 + $0xa8] sm:$0xf]
    %v155 = vld [vmem:[#allocation6 + $0xac] sm:$0xf]
    %v156 = vld [vmem:[#allocation6 + $0xb0] sm:$0xf]
    %v157 = vld [vmem:[#allocation6 + $0xb4] sm:$0xf]
    %v158 = vld [vmem:[#allocation6 + $0xb8] sm:$0xf]
    %v159 = vld [vmem:[#allocation6 + $0xbc] sm:$0xf]
    %v192 = vunpack.c.l.b16 %v80
    %v193 = vunpack.c.h.b16 %v80
    %v194 = vunpack.c.l.b16 %v81
    %v195 = vunpack.c.l.b16 %v82
    %v196 = vunpack.c.h.b16 %v82
    %v197 = vunpack.c.l.b16 %v83
    %v198 = vunpack.c.l.b16 %v84
    %v199 = vunpack.c.h.b16 %v84
    %v200 = vunpack.c.l.b16 %v85
    %v201 = vunpack.c.l.b16 %v86
    %v202 = vunpack.c.h.b16 %v86
    %v203 = vunpack.c.l.b16 %v87
    %v204 = vunpack.c.l.b16 %v88
    %v205 = vunpack.c.h.b16 %v88
    %v206 = vunpack.c.l.b16 %v89
    %v207 = vunpack.c.l.b16 %v90
    %v208 = vunpack.c.h.b16 %v90
    %v209 = vunpack.c.l.b16 %v91
    %v210 = vunpack.c.l.b16 %v92
    %v211 = vunpack.c.h.b16 %v92
    %v212 = vunpack.c.l.b16 %v93
    %v213 = vunpack.c.l.b16 %v94
    %v214 = vunpack.c.h.b16 %v94
    %v215 = vunpack.c.l.b16 %v95
    %v216 = vunpack.c.l.b16 %v96
    %v217 = vunpack.c.h.b16 %v96
    %v218 = vunpack.c.l.b16 %v97
    %v219 = vunpack.c.l.b16 %v98
    %v220 = vunpack.c.h.b16 %v98
    %v221 = vunpack.c.l.b16 %v99
    %v222 = vunpack.c.l.b16 %v100
    %v223 = vunpack.c.h.b16 %v100
    %v224 = vunpack.c.l.b16 %v101
    %v225 = vunpack.c.l.b16 %v102
    %v226 = vunpack.c.h.b16 %v102
    %v227 = vunpack.c.l.b16 %v103
    %v228 = vunpack.c.l.b16 %v104
    %v229 = vunpack.c.h.b16 %v104
    %v230 = vunpack.c.l.b16 %v105
    %v231 = vunpack.c.l.b16 %v106
    %v232 = vunpack.c.h.b16 %v106
    %v233 = vunpack.c.l.b16 %v107
    %v234 = vunpack.c.l.b16 %v108
    %v235 = vunpack.c.h.b16 %v108
    %v236 = vunpack.c.l.b16 %v109
    %v237 = vunpack.c.l.b16 %v110
    %v238 = vunpack.c.h.b16 %v110
    %v239 = vunpack.c.l.b16 %v111
    %v240 = vpack.c.b16 %v195, %v192
    %v241 = vpack.c.b16 %v196, %v193
    %v242 = vpack.c.b16 %v197, %v194
    %v243 = vpack.c.b16 %v201, %v198
    %v244 = vpack.c.b16 %v202, %v199
    %v245 = vpack.c.b16 %v203, %v200
    %v246 = vpack.c.b16 %v207, %v204
    %v247 = vpack.c.b16 %v208, %v205
    %v248 = vpack.c.b16 %v209, %v206
    %v249 = vpack.c.b16 %v213, %v210
    %v250 = vpack.c.b16 %v214, %v211
    %v251 = vpack.c.b16 %v215, %v212
    %v252 = vpack.c.b16 %v219, %v216
    %v253 = vpack.c.b16 %v220, %v217
    %v254 = vpack.c.b16 %v221, %v218
    %v255 = vpack.c.b16 %v225, %v222
    %v256 = vpack.c.b16 %v226, %v223
    %v257 = vpack.c.b16 %v227, %v224
    %v258 = vpack.c.b16 %v231, %v228
    %v259 = vpack.c.b16 %v232, %v229
    %v260 = vpack.c.b16 %v233, %v230
    %v261 = vpack.c.b16 %v237, %v234
    %v262 = vpack.c.b16 %v238, %v235
    %v263 = vpack.c.b16 %v239, %v236
    %v336 = vunpack.c.l.b16 %v112
    %v337 = vunpack.c.l.b16 %v113
    %v338 = vunpack.c.l.b16 %v114
    %v339 = vunpack.c.l.b16 %v115
    %v340 = vunpack.c.l.b16 %v116
    %v341 = vunpack.c.l.b16 %v117
    %v342 = vunpack.c.l.b16 %v118
    %v343 = vunpack.c.l.b16 %v119
    %v344 = vunpack.c.l.b16 %v120
    %v345 = vunpack.c.l.b16 %v121
    %v346 = vunpack.c.l.b16 %v122
    %v347 = vunpack.c.l.b16 %v123
    %v348 = vunpack.c.l.b16 %v124
    %v349 = vunpack.c.l.b16 %v125
    %v350 = vunpack.c.l.b16 %v126
    %v351 = vunpack.c.l.b16 %v127
    %v352 = vunpack.c.l.b16 %v128
    %v353 = vunpack.c.l.b16 %v129
    %v354 = vunpack.c.l.b16 %v130
    %v355 = vunpack.c.l.b16 %v131
    %v356 = vunpack.c.l.b16 %v132
    %v357 = vunpack.c.l.b16 %v133
    %v358 = vunpack.c.l.b16 %v134
    %v359 = vunpack.c.l.b16 %v135
    %v360 = vunpack.c.l.b16 %v136
    %v361 = vunpack.c.l.b16 %v137
    %v362 = vunpack.c.l.b16 %v138
    %v363 = vunpack.c.l.b16 %v139
    %v364 = vunpack.c.l.b16 %v140
    %v365 = vunpack.c.l.b16 %v141
    %v366 = vunpack.c.l.b16 %v142
    %v367 = vunpack.c.l.b16 %v143
    %v368 = vunpack.c.l.b16 %v144
    %v369 = vunpack.c.l.b16 %v145
    %v370 = vunpack.c.l.b16 %v146
    %v371 = vunpack.c.l.b16 %v147
    %v372 = vunpack.c.l.b16 %v148
    %v373 = vunpack.c.l.b16 %v149
    %v374 = vunpack.c.l.b16 %v150
    %v375 = vunpack.c.l.b16 %v151
    %v376 = vunpack.c.l.b16 %v152
    %v377 = vunpack.c.l.b16 %v153
    %v378 = vunpack.c.l.b16 %v154
    %v379 = vunpack.c.l.b16 %v155
    %v380 = vunpack.c.l.b16 %v156
    %v381 = vunpack.c.l.b16 %v157
    %v382 = vunpack.c.l.b16 %v158
    %v383 = vunpack.c.l.b16 %v159
    %v384 = vpack.c.b16 %v337, %v336
    %v385 = vpack.c.b16 %v339, %v338
    %v386 = vpack.c.b16 %v341, %v340
    %v387 = vpack.c.b16 %v343, %v342
    %v388 = vpack.c.b16 %v345, %v344
    %v389 = vpack.c.b16 %v347, %v346
    %v390 = vpack.c.b16 %v349, %v348
    %v391 = vpack.c.b16 %v351, %v350
    %v392 = vpack.c.b16 %v353, %v352
    %v393 = vpack.c.b16 %v355, %v354
    %v394 = vpack.c.b16 %v357, %v356
    %v395 = vpack.c.b16 %v359, %v358
    %v396 = vpack.c.b16 %v361, %v360
    %v397 = vpack.c.b16 %v363, %v362
    %v398 = vpack.c.b16 %v365, %v364
    %v399 = vpack.c.b16 %v367, %v366
    %v400 = vpack.c.b16 %v369, %v368
    %v401 = vpack.c.b16 %v371, %v370
    %v402 = vpack.c.b16 %v373, %v372
    %v403 = vpack.c.b16 %v375, %v374
    %v404 = vpack.c.b16 %v377, %v376
    %v405 = vpack.c.b16 %v379, %v378
    %v406 = vpack.c.b16 %v381, %v380
    %v407 = vpack.c.b16 %v383, %v382
    %432 = vmatprep.subr.bf16.mxu0 0
    %433 = vmatpush1.bf16.msra.mxu0 %v384
    %434 = vmatprep.subr.bf16.mxu0 0
    %435 = vmatpush1.bf16.msra.mxu0 %v385
    %436 = vmatprep.subr.bf16.mxu0 0
    %437 = vmatpush1.bf16.msra.mxu0 %v386
    %438 = vmatprep.subr.bf16.mxu0 0
    %439 = vmatpush1.bf16.msra.mxu0 %v387
    %440 = vmatprep.subr.bf16.mxu0 0
    %441 = vmatpush1.bf16.msra.mxu0 %v388
    %442 = vmatprep.subr.bf16.mxu0 0
    %443 = vmatpush1.bf16.msra.mxu0 %v389
    %444 = vmatprep.subr.bf16.mxu0 0
    %445 = vmatpush1.bf16.msra.mxu0 %v390
    %446 = vmatprep.subr.bf16.mxu0 0
    %447 = vmatpush1.bf16.msra.mxu0 %v391
    %448 = vmatprep.subr.bf16.mxu0 0
    %449 = vmatpush1.bf16.msra.mxu0 %v392
    %450 = vmatprep.subr.bf16.mxu0 0
    %451 = vmatpush1.bf16.msra.mxu0 %v393
    %452 = vmatprep.subr.bf16.mxu0 0
    %453 = vmatpush1.bf16.msra.mxu0 %v394
    %454 = vmatprep.subr.bf16.mxu0 0
    %455 = vmatpush1.bf16.msra.mxu0 %v395
    %456 = vmatprep.subr.bf16.mxu0 0
    %457 = vmatpush1.bf16.msra.mxu0 %v396
    %458 = vmatprep.subr.bf16.mxu0 0
    %459 = vmatpush1.bf16.msra.mxu0 %v397
    %460 = vmatprep.subr.bf16.mxu0 0
    %461 = vmatpush1.bf16.msra.mxu0 %v398
    %462 = vmatprep.subr.bf16.mxu0 0
    %463 = vmatpush1.bf16.msra.mxu0 %v399
    %464 = vmatprep.mubr.bf16.mxu0 %v241
    %465 = vmatmul.mubr.bf16.gmra.mrb[0].mxu0 %v240
    %v466 = vpop.f32.mrb[0].mxu0
    %v467 = vadd.f32 0.0, %v466
    %v468 = vpop.f32.mrb[0].mxu0
    %v469 = vpop.f32.mrb[0].mxu0
    %v470 = vadd.f32 0.0, %v469
    %v471 = vpop.f32.mrb[0].mxu0
    %472 = vmatprep.mubr.bf16.mxu0 %v244
    %473 = vmatmul.mubr.bf16.gmra.mrb[0].mxu0 %v243
    %v474 = vpop.f32.mrb[0].mxu0
    %v475 = vadd.f32 0.0, %v474
    %v476 = vpop.f32.mrb[0].mxu0
    %v477 = vpop.f32.mrb[0].mxu0
    %v478 = vadd.f32 0.0, %v477
    %v479 = vpop.f32.mrb[0].mxu0
    %480 = vmatprep.mubr.bf16.mxu0 %v247
    %481 = vmatmul.mubr.bf16.gmra.mrb[0].mxu0 %v246
    %v482 = vpop.f32.mrb[0].mxu0
    %v483 = vadd.f32 0.0, %v482
    %v484 = vpop.f32.mrb[0].mxu0
    %v485 = vpop.f32.mrb[0].mxu0
    %v486 = vadd.f32 0.0, %v485
    %v487 = vpop.f32.mrb[0].mxu0
    %488 = vmatprep.mubr.bf16.mxu0 %v250
    %489 = vmatmul.mubr.bf16.gmra.mrb[0].mxu0 %v249
    %v490 = vpop.f32.mrb[0].mxu0
    %v491 = vadd.f32 0.0, %v490
    %v492 = vpop.f32.mrb[0].mxu0
    %v493 = vpop.f32.mrb[0].mxu0
    %v494 = vadd.f32 0.0, %v493
    %v495 = vpop.f32.mrb[0].mxu0
    %496 = vmatprep.mubr.bf16.mxu0 %v253
    %497 = vmatmul.mubr.bf16.gmra.mrb[0].mxu0 %v252
    %v498 = vpop.f32.mrb[0].mxu0
    %v499 = vadd.f32 0.0, %v498
    %v500 = vpop.f32.mrb[0].mxu0
    %v501 = vpop.f32.mrb[0].mxu0
    %v502 = vadd.f32 0.0, %v501
    %v503 = vpop.f32.mrb[0].mxu0
    %504 = vmatprep.mubr.bf16.mxu0 %v256
    %505 = vmatmul.mubr.bf16.gmra.mrb[0].mxu0 %v255
    %v506 = vpop.f32.mrb[0].mxu0
    %v507 = vadd.f32 0.0, %v506
    %v508 = vpop.f32.mrb[0].mxu0
    %v509 = vpop.f32.mrb[0].mxu0
    %v510 = vadd.f32 0.0, %v509
    %v511 = vpop.f32.mrb[0].mxu0
    %512 = vmatprep.mubr.bf16.mxu0 %v259
    %513 = vmatmul.mubr.bf16.gmra.mrb[0].mxu0 %v258
    %v514 = vpop.f32.mrb[0].mxu0
    %v515 = vadd.f32 0.0, %v514
    %v516 = vpop.f32.mrb[0].mxu0
    %v517 = vpop.f32.mrb[0].mxu0
    %v518 = vadd.f32 0.0, %v517
    %v519 = vpop.f32.mrb[0].mxu0
    %520 = vmatprep.mubr.bf16.mxu0 %v262
    %521 = vmatmul.mubr.bf16.gmra.mrb[0].mxu0 %v261
    %v522 = vpop.f32.mrb[0].mxu0
    %v523 = vadd.f32 0.0, %v522
    %v524 = vpop.f32.mrb[0].mxu0
    %v525 = vpop.f32.mrb[0].mxu0
    %v526 = vadd.f32 0.0, %v525
    %v527 = vpop.f32.mrb[0].mxu0
    %528 = vdwg.mxu0
    %529 = vmatprep.subr.bf16.mxu0 0
    %530 = vmatpush1.bf16.msra.mxu0 %v400
    %531 = vmatprep.subr.bf16.mxu0 0
    %532 = vmatpush1.bf16.msra.mxu0 %v401
    %533 = vmatprep.subr.bf16.mxu0 0
    %534 = vmatpush1.bf16.msra.mxu0 %v402
    %535 = vmatprep.subr.bf16.mxu0 0
    %536 = vmatpush1.bf16.msra.mxu0 %v403
    %537 = vmatprep.subr.bf16.mxu0 0
    %538 = vmatpush1.bf16.msra.mxu0 %v404
    %539 = vmatprep.subr.bf16.mxu0 0
    %540 = vmatpush1.bf16.msra.mxu0 %v405
    %541 = vmatprep.subr.bf16.mxu0 0
    %542 = vmatpush1.bf16.msra.mxu0 %v406
    %543 = vmatprep.subr.bf16.mxu0 0
    %544 = vmatpush1.bf16.msra.mxu0 %v407
    %545 = vmatprep.subr.bf16.mxu0 0
    %546 = vmatpush1.bf16.msra.mxu0 0
    %547 = vmatprep.subr.bf16.mxu0 0
    %548 = vmatpush1.bf16.msra.mxu0 0
    %549 = vmatprep.subr.bf16.mxu0 0
    %550 = vmatpush1.bf16.msra.mxu0 0
    %551 = vmatprep.subr.bf16.mxu0 0
    %552 = vmatpush1.bf16.msra.mxu0 0
    %553 = vmatprep.subr.bf16.mxu0 0
    %554 = vmatpush1.bf16.msra.mxu0 0
    %555 = vmatprep.subr.bf16.mxu0 0
    %556 = vmatpush1.bf16.msra.mxu0 0
    %557 = vmatprep.subr.bf16.mxu0 0
    %558 = vmatpush1.bf16.msra.mxu0 0
    %559 = vmatprep.subr.bf16.mxu0 0
    %560 = vmatpush1.bf16.msra.mxu0 0
    %561 = vmatprep.mubr.bf16.mxu0 0
    %562 = vmatmul.mubr.bf16.gmra.mrb[0].mxu0 %v242
    %v563 = vpop.f32.mrb[0].mxu0
    %v564 = vadd.f32 %v467, %v563
    %v565 = vpop.f32.mrb[0].mxu0
    %v566 = vpop.f32.mrb[0].mxu0
    %v567 = vadd.f32 %v470, %v566
    %v568 = vpop.f32.mrb[0].mxu0
    %569 = vmatprep.mubr.bf16.mxu0 0
    %570 = vmatmul.mubr.bf16.gmra.mrb[0].mxu0 %v245
    %v571 = vpop.f32.mrb[0].mxu0
    %v572 = vadd.f32 %v475, %v571
    %v573 = vpop.f32.mrb[0].mxu0
    %v574 = vpop.f32.mrb[0].mxu0
    %v575 = vadd.f32 %v478, %v574
    %v576 = vpop.f32.mrb[0].mxu0
    %577 = vmatprep.mubr.bf16.mxu0 0
    %578 = vmatmul.mubr.bf16.gmra.mrb[0].mxu0 %v248
    %v579 = vpop.f32.mrb[0].mxu0
    %v580 = vadd.f32 %v483, %v579
    %v581 = vpop.f32.mrb[0].mxu0
    %v582 = vpop.f32.mrb[0].mxu0
    %v583 = vadd.f32 %v486, %v582
    %v584 = vpop.f32.mrb[0].mxu0
    %585 = vmatprep.mubr.bf16.mxu0 0
    %586 = vmatmul.mubr.bf16.gmra.mrb[0].mxu0 %v251
    %v587 = vpop.f32.mrb[0].mxu0
    %v588 = vadd.f32 %v491, %v587
    %v589 = vpop.f32.mrb[0].mxu0
    %v590 = vpop.f32.mrb[0].mxu0
    %v591 = vadd.f32 %v494, %v590
    %v592 = vpop.f32.mrb[0].mxu0
    %593 = vmatprep.mubr.bf16.mxu0 0
    %594 = vmatmul.mubr.bf16.gmra.mrb[0].mxu0 %v254
    %v595 = vpop.f32.mrb[0].mxu0
    %v596 = vadd.f32 %v499, %v595
    %v597 = vpop.f32.mrb[0].mxu0
    %v598 = vpop.f32.mrb[0].mxu0
    %v599 = vadd.f32 %v502, %v598
    %v600 = vpop.f32.mrb[0].mxu0
    %601 = vmatprep.mubr.bf16.mxu0 0
    %602 = vmatmul.mubr.bf16.gmra.mrb[0].mxu0 %v257
    %v603 = vpop.f32.mrb[0].mxu0
    %v604 = vadd.f32 %v507, %v603
    %v605 = vpop.f32.mrb[0].mxu0
    %v606 = vpop.f32.mrb[0].mxu0
    %v607 = vadd.f32 %v510, %v606
    %v608 = vpop.f32.mrb[0].mxu0
    %609 = vmatprep.mubr.bf16.mxu0 0
    %610 = vmatmul.mubr.bf16.gmra.mrb[0].mxu0 %v260
    %v611 = vpop.f32.mrb[0].mxu0
    %v612 = vadd.f32 %v515, %v611
    %v613 = vpop.f32.mrb[0].mxu0
    %v614 = vpop.f32.mrb[0].mxu0
    %v615 = vadd.f32 %v518, %v614
    %v616 = vpop.f32.mrb[0].mxu0
    %617 = vmatprep.mubr.bf16.mxu0 0
    %618 = vmatmul.mubr.bf16.gmra.mrb[0].mxu0 %v263
    %v619 = vpop.f32.mrb[0].mxu0
    %v620 = vadd.f32 %v523, %v619
    %v621 = vpop.f32.mrb[0].mxu0
    %v622 = vpop.f32.mrb[0].mxu0
    %v623 = vadd.f32 %v526, %v622
    %v624 = vpop.f32.mrb[0].mxu0
    %625 = vdwg.mxu0
    %v626 = vadd.f32 %v64, %v564
    %v627 = vadd.f32 %v65, %v567
    %v628 = vadd.f32 %v66, %v572
    %v629 = vadd.f32 %v67, %v575
    %v630 = vadd.f32 %v68, %v580
    %v631 = vadd.f32 %v69, %v583
    %v632 = vadd.f32 %v70, %v588
    %v633 = vadd.f32 %v71, %v591
    %v634 = vadd.f32 %v72, %v596
    %v635 = vadd.f32 %v73, %v599
    %v636 = vadd.f32 %v74, %v604
    %v637 = vadd.f32 %v75, %v607
    %v638 = vadd.f32 %v76, %v612
    %v639 = vadd.f32 %v77, %v615
    %v640 = vadd.f32 %v78, %v620
    %v641 = vadd.f32 %v79, %v623
    %642 = vst [vmem:[#allocation2] sm:$0xff] %v626
    %643 = vst [vmem:[#allocation2 + $0x8] sm:$0xff] %v627
    %644 = vst [vmem:[#allocation2 + $0x10] sm:$0xff] %v628
    %645 = vst [vmem:[#allocation2 + $0x18] sm:$0xff] %v629
    %646 = vst [vmem:[#allocation2 + $0x20] sm:$0xff] %v630
    %647 = vst [vmem:[#allocation2 + $0x28] sm:$0xff] %v631
    %648 = vst [vmem:[#allocation2 + $0x30] sm:$0xff] %v632
    %649 = vst [vmem:[#allocation2 + $0x38] sm:$0xff] %v633
    %650 = vst [vmem:[#allocation2 + $0x40] sm:$0xff] %v634
    %651 = vst [vmem:[#allocation2 + $0x48] sm:$0xff] %v635
    %652 = vst [vmem:[#allocation2 + $0x50] sm:$0xff] %v636
    %653 = vst [vmem:[#allocation2 + $0x58] sm:$0xff] %v637
    %654 = vst [vmem:[#allocation2 + $0x60] sm:$0xff] %v638
    %655 = vst [vmem:[#allocation2 + $0x68] sm:$0xff] %v639
    %656 = vst [vmem:[#allocation2 + $0x70] sm:$0xff] %v640
    %657 = vst [vmem:[#allocation2 + $0x78] sm:$0xff] %v641
    // Predicated region
    $region26: #{tpu_custom_call.1} parent=1 // pred_check
      %p658 = pneg %p44
    $region27: #{tpu_custom_call.1} parent=1 // pred_check_branch
      %660 = sbr.rel (%p658) target = $region29
    $region28: #{tpu_custom_call.1} parent=1 // pred_region
      %v661 = vld [vmem:[#allocation2] sm:$0xff]
      %v662 = vld [vmem:[#allocation2 + $0x8] sm:$0xff]
      %v663 = vld [vmem:[#allocation2 + $0x10] sm:$0xff]
      %v664 = vld [vmem:[#allocation2 + $0x18] sm:$0xff]
      %v665 = vld [vmem:[#allocation2 + $0x20] sm:$0xff]
      %v666 = vld [vmem:[#allocation2 + $0x28] sm:$0xff]
      %v667 = vld [vmem:[#allocation2 + $0x30] sm:$0xff]
      %v668 = vld [vmem:[#allocation2 + $0x38] sm:$0xff]
      %v669 = vld [vmem:[#allocation2 + $0x40] sm:$0xff]
      %v670 = vld [vmem:[#allocation2 + $0x48] sm:$0xff]
      %v671 = vld [vmem:[#allocation2 + $0x50] sm:$0xff]
      %v672 = vld [vmem:[#allocation2 + $0x58] sm:$0xff]
      %v673 = vld [vmem:[#allocation2 + $0x60] sm:$0xff]
      %v674 = vld [vmem:[#allocation2 + $0x68] sm:$0xff]
      %v675 = vld [vmem:[#allocation2 + $0x70] sm:$0xff]
      %v676 = vld [vmem:[#allocation2 + $0x78] sm:$0xff]
      %v677 = vld [vmem:[%s2] sm:$0x1]
      %v679 = vlaneseq
      %v680 = vshrl.u32 %v679, 7
      %v681 = vsub.s32 0, %v680
      %v682 = vrot.slane %v677, %v681
      %v684 = vadd.f32 %v661, %v682
      %v685 = vadd.f32 %v662, %v682
      %v686 = vadd.f32 %v663, %v682
      %v687 = vadd.f32 %v664, %v682
      %v688 = vadd.f32 %v665, %v682
      %v689 = vadd.f32 %v666, %v682
      %v690 = vadd.f32 %v667, %v682
      %v691 = vadd.f32 %v668, %v682
      %v692 = vadd.f32 %v669, %v682
      %v693 = vadd.f32 %v670, %v682
      %v694 = vadd.f32 %v671, %v682
      %v695 = vadd.f32 %v672, %v682
      %v696 = vadd.f32 %v673, %v682
      %v697 = vadd.f32 %v674, %v682
      %v698 = vadd.f32 %v675, %v682
      %v699 = vadd.f32 %v676, %v682
      %v700 = vmax.f32 %v684, 0.0
      %v701 = vmax.f32 %v685, 0.0
      %v702 = vmax.f32 %v686, 0.0
      %v703 = vmax.f32 %v687, 0.0
      %v704 = vmax.f32 %v688, 0.0
      %v705 = vmax.f32 %v689, 0.0
      %v706 = vmax.f32 %v690, 0.0
      %v707 = vmax.f32 %v691, 0.0
      %v708 = vmax.f32 %v692, 0.0
      %v709 = vmax.f32 %v693, 0.0
      %v710 = vmax.f32 %v694, 0.0
      %v711 = vmax.f32 %v695, 0.0
      %v712 = vmax.f32 %v696, 0.0
      %v713 = vmax.f32 %v697, 0.0
      %v714 = vmax.f32 %v698, 0.0
      %v715 = vmax.f32 %v699, 0.0
      %716 = vst [vmem:[#allocation8] sm:$0xff] %v700
      %717 = vst [vmem:[#allocation8 + $0x8] sm:$0xff] %v701
      %718 = vst [vmem:[#allocation8 + $0x10] sm:$0xff] %v702
      %719 = vst [vmem:[#allocation8 + $0x18] sm:$0xff] %v703
      %720 = vst [vmem:[#allocation8 + $0x20] sm:$0xff] %v704
      %721 = vst [vmem:[#allocation8 + $0x28] sm:$0xff] %v705
      %722 = vst [vmem:[#allocation8 + $0x30] sm:$0xff] %v706
      %723 = vst [vmem:[#allocation8 + $0x38] sm:$0xff] %v707
      %724 = vst [vmem:[#allocation8 + $0x40] sm:$0xff] %v708
      %725 = vst [vmem:[#allocation8 + $0x48] sm:$0xff] %v709
      %726 = vst [vmem:[#allocation8 + $0x50] sm:$0xff] %v710
      %727 = vst [vmem:[#allocation8 + $0x58] sm:$0xff] %v711
      %728 = vst [vmem:[#allocation8 + $0x60] sm:$0xff] %v712
      %729 = vst [vmem:[#allocation8 + $0x68] sm:$0xff] %v713
      %730 = vst [vmem:[#allocation8 + $0x70] sm:$0xff] %v714
      %731 = vst [vmem:[#allocation8 + $0x78] sm:$0xff] %v715
    $region29: #{tpu_custom_call.1} parent=1 // pred_fallthru
      _
    // Predicated region
    $region30: #{tpu_custom_call.1} parent=1 // pred_check
      _
    $region31: #{tpu_custom_call.1} parent=1 // pred_check_branch
      %733 = sbr.rel (0) target = $region33
    $region32: #{tpu_custom_call.1} parent=1 // pred_region
      %s735 = ssub.s32 2048, 2048
      %736 = vsyncadd [#allocation5], %s735
      %s737 = sshll.u32 [#allocation8], 4
      %s738 = int_to_ptr.vmem [resolvable:$true] %s737
      %743 = dma.vmem_to_hbm [thread:$0]  %s738, 2048, %s3, [#allocation5], 128, 128, 8
    $region33: #{tpu_custom_call.1} parent=1 // pred_fallthru
      _
    // Predicated region
    $region34: #{tpu_custom_call.1} parent=1 // pred_check
      _
    $region35: #{tpu_custom_call.1} parent=1 // pred_check_branch
      %745 = sbr.rel (0) target = $region37
    $region36: #{tpu_custom_call.1} parent=1 // pred_region
      %746 = dma.done [#allocation5], 2048
    $region37: #{tpu_custom_call.1} parent=1 // pred_fallthru
      _
    %747 = vsyncpa [#allocation4], 1
    %748 = vsyncpa [#allocation7], 1
    %749 = vsyncpa [#allocation5], 1

</llo_original>
